<compile_context>
chip_gen: v6e
topology: v6e:2x2x1
jax: 0.10.0
libtpu: 0.0.40
codegen_flags: <defaults>
</compile_context>

<pallas_src>
import jax
import jax.numpy as jnp
from jax.experimental import pallas as pl
from jax.experimental.pallas import tpu as pltpu

# Logical (PyTorch-module) feature dims.
D_IN = 132
D_HID1 = 132
D_HID2 = 264
D_OUT = 132

# Lane/MXU-clean padded dims used by the kernel (multiples of 128).
P_IN = 256
P_HID1 = 256
P_HID2 = 384
P_OUT = 256

_MAX_TILE_B = 1024  # ~1 MiB per double-buffered bf16 (tile_b, 256) block pair


def _round_up(n, m):
    return ((n + m - 1) // m) * m


def _choose_tile_b(B):
    # Aim for >= 4 grid steps (pipelining + v7x megacore), cap the tile at
    # _MAX_TILE_B, keep it a multiple of 16 (bf16 sublane packing).  For small
    # batches use one full-extent block (full-dim blocks are always legal).
    t = min(_MAX_TILE_B, _round_up(max(pl.cdiv(B, 4), 1), 16))
    if t >= B:
        return B
    return t


def _mlp_kernel(x_ref, w1_ref, b1_ref, w2_ref, b2_ref, w3_ref, b3_ref, o_ref):
    # bf16 operands on the MXU, f32 accumulation; bias-add / ReLU in f32.
    x = x_ref[...]                                            # (tile_b, 256) bf16

    h1 = jnp.dot(x, w1_ref[...], preferred_element_type=jnp.float32) + b1_ref[...]
    h1 = jnp.maximum(h1, 0.0)

    h2 = jnp.dot(h1.astype(jnp.bfloat16), w2_ref[...],
                 preferred_element_type=jnp.float32) + b2_ref[...]
    h2 = jnp.maximum(h2, 0.0)

    h3 = jnp.dot(h2.astype(jnp.bfloat16), w3_ref[...],
                 preferred_element_type=jnp.float32) + b3_ref[...]
    h3 = jnp.maximum(h3, 0.0)

    o_ref[...] = h3.astype(o_ref.dtype)                       # (tile_b, 256) bf16


def pcombination_net(x, params, *, tile_b=None):
    """PCombinationNet forward.

    x: preferably (B, 256) bf16 with columns >= 132 zero (producer hands the
       padded bf16 activation directly -> no extra HBM passes here); a
       (B, 132) float input is also accepted and converted at this boundary.
    Returns (B, 256) bf16; columns [:132] are the module's output, columns
    [132:] are exactly zero.  Strip the padding at the consumer.
    """
    if x.shape[1] == D_IN:
        # Model-boundary conversion (should be done once by the producer, not
        # per call): zero-pad features to the lane-clean width and cast bf16.
        x = jnp.pad(x.astype(jnp.bfloat16), ((0, 0), (0, P_IN - D_IN)))
    assert x.shape[1] == P_IN and x.dtype == jnp.bfloat16

    B = x.shape[0]
    if tile_b is None:
        tile_b = _choose_tile_b(B)
    assert tile_b == B or tile_b % 16 == 0

    w1, b1 = params["w1"], params["b1"]   # (256, 256) bf16, (1, 256) f32
    w2, b2 = params["w2"], params["b2"]   # (256, 384) bf16, (1, 384) f32
    w3, b3 = params["w3"], params["b3"]   # (384, 256) bf16, (1, 256) f32

    grid = (pl.cdiv(B, tile_b),)          # ragged last block handled by Pallas

    def batch_map(i):
        return (i, 0)

    def whole_map(i):
        return (0, 0)

    return pl.pallas_call(
        _mlp_kernel,
        out_shape=jax.ShapeDtypeStruct((B, P_OUT), jnp.bfloat16),
        grid_spec=pltpu.PrefetchScalarGridSpec(
            num_scalar_prefetch=0,
            grid=grid,
            in_specs=[
                pl.BlockSpec((tile_b, P_IN), batch_map),
                pl.BlockSpec((P_IN, P_HID1), whole_map),
                pl.BlockSpec((1, P_HID1), whole_map),
                pl.BlockSpec((P_HID1, P_HID2), whole_map),
                pl.BlockSpec((1, P_HID2), whole_map),
                pl.BlockSpec((P_HID2, P_OUT), whole_map),
                pl.BlockSpec((1, P_OUT), whole_map),
            ],
            out_specs=pl.BlockSpec((tile_b, P_OUT), batch_map),
        ),
        compiler_params=pltpu.CompilerParams(
            dimension_semantics=("parallel",),
            vmem_limit_bytes=32 * 1024 * 1024,
        ),
    )(x, w1, b1, w2, b2, w3, b3)


def init_params(key):
    """Deterministic synthetic params (PyTorch-Linear-like uniform fan-in init).

    Kernel weights are stored pre-transposed (in, out), zero-padded to the
    lane-clean dims and cast to bf16; biases stay f32 (1, out) rows, zero
    padded.  Unpadded copies are kept under "ref" for the pure-JAX reference.
    """
    ks = jax.random.split(key, 6)

    def linear(kw, kb, fan_in, fan_out, pad_in, pad_out):
        bound = 1.0 / jnp.sqrt(fan_in)
        w = jax.random.uniform(kw, (fan_in, fan_out), jnp.float32, -bound, bound)
        b = jax.random.uniform(kb, (1, fan_out), jnp.float32, -bound, bound)
        w_bf16 = w.astype(jnp.bfloat16)
        w_pad = jnp.pad(w_bf16, ((0, pad_in - fan_in), (0, pad_out - fan_out)))
        b_pad = jnp.pad(b, ((0, 0), (0, pad_out - fan_out)))
        return w_pad, b_pad, w_bf16, b

    w1, b1, rw1, rb1 = linear(ks[0], ks[1], D_IN, D_HID1, P_IN, P_HID1)
    w2, b2, rw2, rb2 = linear(ks[2], ks[3], D_HID1, D_HID2, P_HID1, P_HID2)
    w3, b3, rw3, rb3 = linear(ks[4], ks[5], D_HID2, D_OUT, P_HID2, P_OUT)
    return {
        "w1": w1, "b1": b1, "w2": w2, "b2": b2, "w3": w3, "b3": b3,
        "ref": {"w1": rw1, "b1": rb1, "w2": rw2, "b2": rb2, "w3": rw3, "b3": rb3},
    }


def reference(x, ref_params):
    """Original module math with the kernel's precision path:
    bf16 matmul operands, f32 accumulation, f32 bias-add / ReLU."""
    p = ref_params

    def lin(h, w, b):
        return jnp.dot(h.astype(jnp.bfloat16), w,
                       preferred_element_type=jnp.float32) + b

    h = jnp.maximum(lin(x, p["w1"], p["b1"]), 0.0)
    h = jnp.maximum(lin(h, p["w2"], p["b2"]), 0.0)
    h = jnp.maximum(lin(h, p["w3"], p["b3"]), 0.0)
    return h


if __name__ == "__main__":
    key = jax.random.PRNGKey(0)
    k_p, k_x, k_x2 = jax.random.split(key, 3)

    params = init_params(k_p)

    def check(B, kx, tile_b=None):
        x = jax.random.normal(kx, (B, D_IN), jnp.float32)
        # Producer-side boundary prep (done once in real use, not per call).
        x_p = jnp.pad(x.astype(jnp.bfloat16), ((0, 0), (0, P_IN - D_IN)))
        out = jax.block_until_ready(pcombination_net(x_p, params, tile_b=tile_b))
        assert out.shape == (B, P_OUT) and out.dtype == jnp.bfloat16
        # Padding lanes must be exactly zero (zero weights + zero bias + ReLU).
        assert bool(jnp.all(out[:, D_OUT:] == 0))
        ref = reference(x, params["ref"])
        got = out[:, :D_OUT].astype(jnp.float32)
        assert jnp.allclose(got, ref, atol=1e-2, rtol=1e-2), (
            float(jnp.max(jnp.abs(got - ref))))

    # Small-batch case (module's typical usage): single full-extent block.
    check(8, k_x)
    # Larger batch: tile_b=80 -> 4 grid steps, ragged (masked) last block.
    check(300, k_x2)

    print("KERNEL_OK")
</pallas_src>

<mosaic_0001>
module attributes {stable_mosaic.version = 11 : i64} {
  func.func @_mlp_kernel(%arg0: i32, %arg1: memref<8x256xbf16, #tpu.memory_space<vmem>>, %arg2: memref<256x256xbf16, #tpu.memory_space<vmem>>, %arg3: memref<1x256xf32, #tpu.memory_space<vmem>>, %arg4: memref<256x384xbf16, #tpu.memory_space<vmem>>, %arg5: memref<1x384xf32, #tpu.memory_space<vmem>>, %arg6: memref<384x256xbf16, #tpu.memory_space<vmem>>, %arg7: memref<1x256xf32, #tpu.memory_space<vmem>>, %arg8: memref<8x256xbf16, #tpu.memory_space<vmem>>) attributes {dimension_semantics = [#tpu.dimension_semantics<parallel>], iteration_bounds = array<i64: 1>, scalar_prefetch = 0 : i64, scratch_operands = 0 : i64, tpu.core_type = #tpu.core_type<tc>, window_params = [{transform_indices = @transform_0, window_bounds = array<i64: 8, 256>}, {pipeline_mode = #tpu.pipeline_mode<synchronous>, transform_indices = @transform_1, window_bounds = array<i64: 256, 256>}, {pipeline_mode = #tpu.pipeline_mode<synchronous>, transform_indices = @transform_2, window_bounds = array<i64: 1, 256>}, {pipeline_mode = #tpu.pipeline_mode<synchronous>, transform_indices = @transform_3, window_bounds = array<i64: 256, 384>}, {pipeline_mode = #tpu.pipeline_mode<synchronous>, transform_indices = @transform_4, window_bounds = array<i64: 1, 384>}, {pipeline_mode = #tpu.pipeline_mode<synchronous>, transform_indices = @transform_5, window_bounds = array<i64: 384, 256>}, {pipeline_mode = #tpu.pipeline_mode<synchronous>, transform_indices = @transform_6, window_bounds = array<i64: 1, 256>}, {transform_indices = @transform_7, window_bounds = array<i64: 8, 256>}]} {
    %c0 = arith.constant 0 : index
    %c0_0 = arith.constant 0 : index
    %0 = vector.load %arg1[%c0, %c0_0] : memref<8x256xbf16, #tpu.memory_space<vmem>>, vector<8x256xbf16>
    %c0_1 = arith.constant 0 : index
    %c0_2 = arith.constant 0 : index
    %1 = vector.load %arg2[%c0_1, %c0_2] : memref<256x256xbf16, #tpu.memory_space<vmem>>, vector<256x256xbf16>
    %cst = arith.constant dense<0.000000e+00> : vector<8x256xf32>
    %2 = tpu.matmul %0, %1, %cst {dimension_numbers = #tpu.dot_dimension_numbers<[1], [0], [0], [1], [0, 0, 1, 1], [], []>} : vector<8x256xbf16>, vector<256x256xbf16>, vector<8x256xf32> -> vector<8x256xf32>
    %c0_3 = arith.constant 0 : index
    %c0_4 = arith.constant 0 : index
    %3 = vector.load %arg3[%c0_3, %c0_4] : memref<1x256xf32, #tpu.memory_space<vmem>>, vector<1x256xf32>
    %4 = vector.broadcast %3 : vector<1x256xf32> to vector<8x256xf32>
    %5 = arith.addf %2, %4 : vector<8x256xf32>
    %cst_5 = arith.constant 0.000000e+00 : f32
    %6 = vector.broadcast %cst_5 : f32 to vector<8x256xf32>
    %7 = arith.maximumf %5, %6 : vector<8x256xf32>
    %8 = arith.truncf %7 : vector<8x256xf32> to vector<8x256xbf16>
    %c0_6 = arith.constant 0 : index
    %c0_7 = arith.constant 0 : index
    %9 = vector.load %arg4[%c0_6, %c0_7] : memref<256x384xbf16, #tpu.memory_space<vmem>>, vector<256x384xbf16>
    %cst_8 = arith.constant dense<0.000000e+00> : vector<8x384xf32>
    %10 = tpu.matmul %8, %9, %cst_8 {dimension_numbers = #tpu.dot_dimension_numbers<[1], [0], [0], [1], [0, 0, 1, 1], [], []>} : vector<8x256xbf16>, vector<256x384xbf16>, vector<8x384xf32> -> vector<8x384xf32>
    %c0_9 = arith.constant 0 : index
    %c0_10 = arith.constant 0 : index
    %11 = vector.load %arg5[%c0_9, %c0_10] : memref<1x384xf32, #tpu.memory_space<vmem>>, vector<1x384xf32>
    %12 = vector.broadcast %11 : vector<1x384xf32> to vector<8x384xf32>
    %13 = arith.addf %10, %12 : vector<8x384xf32>
    %cst_11 = arith.constant 0.000000e+00 : f32
    %14 = vector.broadcast %cst_11 : f32 to vector<8x384xf32>
    %15 = arith.maximumf %13, %14 : vector<8x384xf32>
    %16 = arith.truncf %15 : vector<8x384xf32> to vector<8x384xbf16>
    %c0_12 = arith.constant 0 : index
    %c0_13 = arith.constant 0 : index
    %17 = vector.load %arg6[%c0_12, %c0_13] : memref<384x256xbf16, #tpu.memory_space<vmem>>, vector<384x256xbf16>
    %cst_14 = arith.constant dense<0.000000e+00> : vector<8x256xf32>
    %18 = tpu.matmul %16, %17, %cst_14 {dimension_numbers = #tpu.dot_dimension_numbers<[1], [0], [0], [1], [0, 0, 1, 1], [], []>} : vector<8x384xbf16>, vector<384x256xbf16>, vector<8x256xf32> -> vector<8x256xf32>
    %c0_15 = arith.constant 0 : index
    %c0_16 = arith.constant 0 : index
    %19 = vector.load %arg7[%c0_15, %c0_16] : memref<1x256xf32, #tpu.memory_space<vmem>>, vector<1x256xf32>
    %20 = vector.broadcast %19 : vector<1x256xf32> to vector<8x256xf32>
    %21 = arith.addf %18, %20 : vector<8x256xf32>
    %cst_17 = arith.constant 0.000000e+00 : f32
    %22 = vector.broadcast %cst_17 : f32 to vector<8x256xf32>
    %23 = arith.maximumf %21, %22 : vector<8x256xf32>
    %24 = arith.truncf %23 : vector<8x256xf32> to vector<8x256xbf16>
    %c0_18 = arith.constant 0 : index
    %c0_19 = arith.constant 0 : index
    %25 = vector.load %arg8[%c0_18, %c0_19] : memref<8x256xbf16, #tpu.memory_space<vmem>>, vector<8x256xbf16>
    tpu.vector_store %arg8[%c0_18, %c0_19], %24 {strides = array<i32>} : memref<8x256xbf16, #tpu.memory_space<vmem>>, vector<8x256xbf16>,
    return
  }
  func.func @transform_0(%arg0: i32) -> (i32, i32) {
    %c0_i32 = arith.constant 0 : i32
    %c0_i32_0 = arith.constant 0 : i32
    return %arg0, %c0_i32 : i32, i32
  }
  func.func @transform_1(%arg0: i32) -> (i32, i32) {
    %c0_i32 = arith.constant 0 : i32
    %c0_i32_0 = arith.constant 0 : i32
    %c0_i32_1 = arith.constant 0 : i32
    return %c0_i32, %c0_i32_0 : i32, i32
  }
  func.func @transform_2(%arg0: i32) -> (i32, i32) {
    %c0_i32 = arith.constant 0 : i32
    %c0_i32_0 = arith.constant 0 : i32
    %c0_i32_1 = arith.constant 0 : i32
    return %c0_i32, %c0_i32_0 : i32, i32
  }
  func.func @transform_3(%arg0: i32) -> (i32, i32) {
    %c0_i32 = arith.constant 0 : i32
    %c0_i32_0 = arith.constant 0 : i32
    %c0_i32_1 = arith.constant 0 : i32
    return %c0_i32, %c0_i32_0 : i32, i32
  }
  func.func @transform_4(%arg0: i32) -> (i32, i32) {
    %c0_i32 = arith.constant 0 : i32
    %c0_i32_0 = arith.constant 0 : i32
    %c0_i32_1 = arith.constant 0 : i32
    return %c0_i32, %c0_i32_0 : i32, i32
  }
  func.func @transform_5(%arg0: i32) -> (i32, i32) {
    %c0_i32 = arith.constant 0 : i32
    %c0_i32_0 = arith.constant 0 : i32
    %c0_i32_1 = arith.constant 0 : i32
    return %c0_i32, %c0_i32_0 : i32, i32
  }
  func.func @transform_6(%arg0: i32) -> (i32, i32) {
    %c0_i32 = arith.constant 0 : i32
    %c0_i32_0 = arith.constant 0 : i32
    %c0_i32_1 = arith.constant 0 : i32
    return %c0_i32, %c0_i32_0 : i32, i32
  }
  func.func @transform_7(%arg0: i32) -> (i32, i32) {
    %c0_i32 = arith.constant 0 : i32
    %c0_i32_0 = arith.constant 0 : i32
    return %arg0, %c0_i32 : i32, i32
  }
}

</mosaic_0001>

<llo_original>
// kernel: tpu_custom_call.1
$region0: #{tpu_custom_call.1}
  #allocation0 [shape = 'u32[]', space=smem, size = 0x4, offset = 0x4, fixed_abs, tag = 'smem constant byte address 0x4 - core index']
  #allocation1 [shape = 'u32[144,128]{1,0:T(1,128)}', space=vmem, size = 0x12000, scoped, tag = 'internal scratch']
  %s0 = inlined_call_operand.hbm [shape: bf16[8,256], index: 0, kind: input, shape index: {}]
  %s1 = inlined_call_operand.hbm [shape: bf16[256,256], index: 1, kind: input, shape index: {}]
  %s2 = inlined_call_operand.vmem [shape: f32[1,256], index: 2, kind: input, shape index: {}]
  %s3 = inlined_call_operand.hbm [shape: bf16[256,384], index: 3, kind: input, shape index: {}]
  %s4 = inlined_call_operand.vmem [shape: f32[1,384], index: 4, kind: input, shape index: {}]
  %s5 = inlined_call_operand.hbm [shape: bf16[384,256], index: 5, kind: input, shape index: {}]
  %s6 = inlined_call_operand.vmem [shape: f32[1,256], index: 6, kind: input, shape index: {}]
  %s7 = inlined_call_operand.hbm [shape: bf16[8,256], index: 7, kind: output, shape index: {}]
  %s8 = sld [smem:[#allocation0]]
  $region54: #{tpu_custom_call.1} parent=0
    _
  %s10 = ssub.s32 1, %s8
  %s11 = scalar_select 0, %s10, %s8
  $region1: #{tpu_custom_call.1} parent=0
    #allocation2 [shape = 'u8[4096]{0}', space=vmem, size = 0x1000, scoped, tag = 'input window, operand 0, single buffered']
    #allocation3 [shape = 's32[1]{0}', space=sflag, size = 0x4, scoped, tag = 'scoped memory for tpu_custom_call.1']
    #allocation4 [shape = 's32[1]{0}', space=sflag, size = 0x4, scoped, tag = 'scoped memory for tpu_custom_call.1']
    #allocation5 [shape = 'u8[131072]{0}', space=vmem, size = 0x20000, scoped, tag = 'input window, operand 1, single buffered']
    #allocation6 [shape = 's32[1]{0}', space=sflag, size = 0x4, scoped, tag = 'scoped memory for tpu_custom_call.1']
    #allocation7 [shape = 'u8[196608]{0}', space=vmem, size = 0x30000, scoped, tag = 'input window, operand 3, single buffered']
    #allocation8 [shape = 'u8[196608]{0}', space=vmem, size = 0x30000, scoped, tag = 'input window, operand 5, single buffered']
    #allocation9 [shape = 's32[1]{0}', space=sflag, size = 0x4, scoped, tag = 'scoped memory for tpu_custom_call.1']
    #allocation10 [shape = 'u8[4096]{0}', space=vmem, size = 0x1000, scoped, tag = 'output window, operand 0, single buffered']
    %12 = vsyncpa [#allocation3], 0
    %13 = vsyncpa [#allocation6], 0
    %14 = vsyncpa [#allocation9], 0
    %15 = vsyncpa [#allocation4], 0
    // Predicated region
    $region2: #{tpu_custom_call.1} parent=1 // pred_check
      _
    $region3: #{tpu_custom_call.1} parent=1 // pred_check_branch
      %17 = sbr.rel (0) target = $region5
    $region4: #{tpu_custom_call.1} parent=1 // pred_region
      %s19 = ssub.s32 128, 128
      %20 = vsyncadd [#allocation3], %s19
      %s22 = sshll.u32 [#allocation2], 4
      %s23 = int_to_ptr.vmem [resolvable:$true] %s22
      %25 = dma.hbm_to_vmem [thread:$0]  %s0, 128, %s23, [#allocation3]
    $region5: #{tpu_custom_call.1} parent=1 // pred_fallthru
      _
    // Predicated region
    $region6: #{tpu_custom_call.1} parent=1 // pred_check
      _
    $region7: #{tpu_custom_call.1} parent=1 // pred_check_branch
      %27 = sbr.rel (0) target = $region9
    $region8: #{tpu_custom_call.1} parent=1 // pred_region
      %s29 = ssub.s32 4096, 4096
      %30 = vsyncadd [#allocation6], %s29
      %s31 = sshll.u32 [#allocation5], 4
      %s32 = int_to_ptr.vmem [resolvable:$true] %s31
      %37 = dma.hbm_to_vmem [thread:$0]  %s1, 4096, %s32, [#allocation6], 128, 128, 8
    $region9: #{tpu_custom_call.1} parent=1 // pred_fallthru
      _
    // Predicated region
    $region10: #{tpu_custom_call.1} parent=1 // pred_check
      _
    $region11: #{tpu_custom_call.1} parent=1 // pred_check_branch
      %39 = sbr.rel (0) target = $region13
    $region12: #{tpu_custom_call.1} parent=1 // pred_region
      _
    $region13: #{tpu_custom_call.1} parent=1 // pred_fallthru
      _
    // Predicated region
    $region14: #{tpu_custom_call.1} parent=1 // pred_check
      _
    $region15: #{tpu_custom_call.1} parent=1 // pred_check_branch
      %41 = sbr.rel (0) target = $region17
    $region16: #{tpu_custom_call.1} parent=1 // pred_region
      %s43 = ssub.s32 6144, 6144
      %44 = vsyncadd [#allocation6], %s43
      %s45 = sshll.u32 [#allocation7], 4
      %s46 = int_to_ptr.vmem [resolvable:$true] %s45
      %51 = dma.hbm_to_vmem [thread:$0]  %s3, 6144, %s46, [#allocation6], 192, 192, 12
    $region17: #{tpu_custom_call.1} parent=1 // pred_fallthru
      _
    // Predicated region
    $region18: #{tpu_custom_call.1} parent=1 // pred_check
      _
    $region19: #{tpu_custom_call.1} parent=1 // pred_check_branch
      %53 = sbr.rel (0) target = $region21
    $region20: #{tpu_custom_call.1} parent=1 // pred_region
      _
    $region21: #{tpu_custom_call.1} parent=1 // pred_fallthru
      _
    // Predicated region
    $region22: #{tpu_custom_call.1} parent=1 // pred_check
      _
    $region23: #{tpu_custom_call.1} parent=1 // pred_check_branch
      %55 = sbr.rel (0) target = $region25
    $region24: #{tpu_custom_call.1} parent=1 // pred_region
      %s57 = ssub.s32 6144, 6144
      %58 = vsyncadd [#allocation9], %s57
      %s59 = sshll.u32 [#allocation8], 4
      %s60 = int_to_ptr.vmem [resolvable:$true] %s59
      %65 = dma.hbm_to_vmem [thread:$0]  %s5, 6144, %s60, [#allocation9], 128, 128, 8
    $region25: #{tpu_custom_call.1} parent=1 // pred_fallthru
      _
    // Predicated region
    $region26: #{tpu_custom_call.1} parent=1 // pred_check
      _
    $region27: #{tpu_custom_call.1} parent=1 // pred_check_branch
      %67 = sbr.rel (0) target = $region29
    $region28: #{tpu_custom_call.1} parent=1 // pred_region
      _
    $region29: #{tpu_custom_call.1} parent=1 // pred_fallthru
      _
    // Predicated region
    $region30: #{tpu_custom_call.1} parent=1 // pred_check
      _
    $region31: #{tpu_custom_call.1} parent=1 // pred_check_branch
      %69 = sbr.rel (0) target = $region33
    $region32: #{tpu_custom_call.1} parent=1 // pred_region
      %70 = dma.done [#allocation3], 128
    $region33: #{tpu_custom_call.1} parent=1 // pred_fallthru
      _
    // Predicated region
    $region34: #{tpu_custom_call.1} parent=1 // pred_check
      _
    $region35: #{tpu_custom_call.1} parent=1 // pred_check_branch
      %72 = sbr.rel (0) target = $region37
    $region36: #{tpu_custom_call.1} parent=1 // pred_region
      %73 = dma.done [#allocation6], 4096
    $region37: #{tpu_custom_call.1} parent=1 // pred_fallthru
      _
    // Predicated region
    $region38: #{tpu_custom_call.1} parent=1 // pred_check
      _
    $region39: #{tpu_custom_call.1} parent=1 // pred_check_branch
      %75 = sbr.rel (0) target = $region41
    $region40: #{tpu_custom_call.1} parent=1 // pred_region
      %76 = dma.done [#allocation6], 6144
    $region41: #{tpu_custom_call.1} parent=1 // pred_fallthru
      _
    // Predicated region
    $region42: #{tpu_custom_call.1} parent=1 // pred_check
      _
    $region43: #{tpu_custom_call.1} parent=1 // pred_check_branch
      %78 = sbr.rel (0) target = $region45
    $region44: #{tpu_custom_call.1} parent=1 // pred_region
      %79 = dma.done [#allocation9], 6144
    $region45: #{tpu_custom_call.1} parent=1 // pred_fallthru
      _
    %v81 = vld [vmem:[#allocation2] sm:$0xff]
    %v82 = vld [vmem:[#allocation5] sm:$0xff]
    %v83 = vld [vmem:[#allocation5 + $0x8] sm:$0xff]
    %v84 = vld [vmem:[#allocation5 + $0x10] sm:$0xff]
    %v85 = vld [vmem:[#allocation5 + $0x18] sm:$0xff]
    %v86 = vld [vmem:[#allocation5 + $0x20] sm:$0xff]
    %v87 = vld [vmem:[#allocation5 + $0x28] sm:$0xff]
    %v88 = vld [vmem:[#allocation5 + $0x30] sm:$0xff]
    %v89 = vld [vmem:[#allocation5 + $0x38] sm:$0xff]
    %v90 = vld [vmem:[#allocation5 + $0x40] sm:$0xff]
    %v91 = vld [vmem:[#allocation5 + $0x48] sm:$0xff]
    %v92 = vld [vmem:[#allocation5 + $0x50] sm:$0xff]
    %v93 = vld [vmem:[#allocation5 + $0x58] sm:$0xff]
    %v94 = vld [vmem:[#allocation5 + $0x60] sm:$0xff]
    %v95 = vld [vmem:[#allocation5 + $0x68] sm:$0xff]
    %v96 = vld [vmem:[#allocation5 + $0x70] sm:$0xff]
    %v97 = vld [vmem:[#allocation5 + $0x78] sm:$0xff]
    %v98 = vld [vmem:[#allocation5 + $0x80] sm:$0xff]
    %v99 = vld [vmem:[#allocation5 + $0x88] sm:$0xff]
    %v100 = vld [vmem:[#allocation5 + $0x90] sm:$0xff]
    %v101 = vld [vmem:[#allocation5 + $0x98] sm:$0xff]
    %v102 = vld [vmem:[#allocation5 + $0xa0] sm:$0xff]
    %v103 = vld [vmem:[#allocation5 + $0xa8] sm:$0xff]
    %v104 = vld [vmem:[#allocation5 + $0xb0] sm:$0xff]
    %v105 = vld [vmem:[#allocation5 + $0xb8] sm:$0xff]
    %v106 = vld [vmem:[#allocation5 + $0xc0] sm:$0xff]
    %v107 = vld [vmem:[#allocation5 + $0xc8] sm:$0xff]
    %v108 = vld [vmem:[#allocation5 + $0xd0] sm:$0xff]
    %v109 = vld [vmem:[#allocation5 + $0xd8] sm:$0xff]
    %v110 = vld [vmem:[#allocation5 + $0xe0] sm:$0xff]
    %v111 = vld [vmem:[#allocation5 + $0xe8] sm:$0xff]
    %v112 = vld [vmem:[#allocation5 + $0xf0] sm:$0xff]
    %v113 = vld [vmem:[#allocation5 + $0xf8] sm:$0xff]
    %v114 = vld [vmem:[%s2] sm:$0x3]
    %v116 = vlaneseq
    %v117 = vshrl.u32 %v116, 7
    %v118 = vsub.s32 0, %v117
    %v119 = vrot.slane %v114, %v118
    %v120 = vlaneseq
    %v121 = vshrl.u32 %v120, 7
    %v122 = vsub.s32 1, %v121
    %v123 = vrot.slane %v114, %v122
    %v127 = vunpack.c.l.b16 %v81
    %v128 = vunpack.c.h.b16 %v81
    %v129 = vpack.c.b16 %v127, %v127
    %v130 = vpack.c.b16 %v128, %v128
    %v165 = vunpack.c.l.b16 %v82
    %v166 = vunpack.c.h.b16 %v82
    %v167 = vunpack.c.l.b16 %v83
    %v168 = vunpack.c.h.b16 %v83
    %v169 = vunpack.c.l.b16 %v84
    %v170 = vunpack.c.h.b16 %v84
    %v171 = vunpack.c.l.b16 %v85
    %v172 = vunpack.c.h.b16 %v85
    %v173 = vunpack.c.l.b16 %v86
    %v174 = vunpack.c.h.b16 %v86
    %v175 = vunpack.c.l.b16 %v87
    %v176 = vunpack.c.h.b16 %v87
    %v177 = vunpack.c.l.b16 %v88
    %v178 = vunpack.c.h.b16 %v88
    %v179 = vunpack.c.l.b16 %v89
    %v180 = vunpack.c.h.b16 %v89
    %v181 = vunpack.c.l.b16 %v90
    %v182 = vunpack.c.h.b16 %v90
    %v183 = vunpack.c.l.b16 %v91
    %v184 = vunpack.c.h.b16 %v91
    %v185 = vunpack.c.l.b16 %v92
    %v186 = vunpack.c.h.b16 %v92
    %v187 = vunpack.c.l.b16 %v93
    %v188 = vunpack.c.h.b16 %v93
    %v189 = vunpack.c.l.b16 %v94
    %v190 = vunpack.c.h.b16 %v94
    %v191 = vunpack.c.l.b16 %v95
    %v192 = vunpack.c.h.b16 %v95
    %v193 = vunpack.c.l.b16 %v96
    %v194 = vunpack.c.h.b16 %v96
    %v195 = vunpack.c.l.b16 %v97
    %v196 = vunpack.c.h.b16 %v97
    %v197 = vunpack.c.l.b16 %v98
    %v198 = vunpack.c.h.b16 %v98
    %v199 = vunpack.c.l.b16 %v99
    %v200 = vunpack.c.h.b16 %v99
    %v201 = vunpack.c.l.b16 %v100
    %v202 = vunpack.c.h.b16 %v100
    %v203 = vunpack.c.l.b16 %v101
    %v204 = vunpack.c.h.b16 %v101
    %v205 = vunpack.c.l.b16 %v102
    %v206 = vunpack.c.h.b16 %v102
    %v207 = vunpack.c.l.b16 %v103
    %v208 = vunpack.c.h.b16 %v103
    %v209 = vunpack.c.l.b16 %v104
    %v210 = vunpack.c.h.b16 %v104
    %v211 = vunpack.c.l.b16 %v105
    %v212 = vunpack.c.h.b16 %v105
    %v213 = vunpack.c.l.b16 %v106
    %v214 = vunpack.c.h.b16 %v106
    %v215 = vunpack.c.l.b16 %v107
    %v216 = vunpack.c.h.b16 %v107
    %v217 = vunpack.c.l.b16 %v108
    %v218 = vunpack.c.h.b16 %v108
    %v219 = vunpack.c.l.b16 %v109
    %v220 = vunpack.c.h.b16 %v109
    %v221 = vunpack.c.l.b16 %v110
    %v222 = vunpack.c.h.b16 %v110
    %v223 = vunpack.c.l.b16 %v111
    %v224 = vunpack.c.h.b16 %v111
    %v225 = vunpack.c.l.b16 %v112
    %v226 = vunpack.c.h.b16 %v112
    %v227 = vunpack.c.l.b16 %v113
    %v228 = vunpack.c.h.b16 %v113
    %v229 = vpack.c.b16 %v167, %v165
    %v230 = vpack.c.b16 %v168, %v166
    %v231 = vpack.c.b16 %v171, %v169
    %v232 = vpack.c.b16 %v172, %v170
    %v233 = vpack.c.b16 %v175, %v173
    %v234 = vpack.c.b16 %v176, %v174
    %v235 = vpack.c.b16 %v179, %v177
    %v236 = vpack.c.b16 %v180, %v178
    %v237 = vpack.c.b16 %v183, %v181
    %v238 = vpack.c.b16 %v184, %v182
    %v239 = vpack.c.b16 %v187, %v185
    %v240 = vpack.c.b16 %v188, %v186
    %v241 = vpack.c.b16 %v191, %v189
    %v242 = vpack.c.b16 %v192, %v190
    %v243 = vpack.c.b16 %v195, %v193
    %v244 = vpack.c.b16 %v196, %v194
    %v245 = vpack.c.b16 %v199, %v197
    %v246 = vpack.c.b16 %v200, %v198
    %v247 = vpack.c.b16 %v203, %v201
    %v248 = vpack.c.b16 %v204, %v202
    %v249 = vpack.c.b16 %v207, %v205
    %v250 = vpack.c.b16 %v208, %v206
    %v251 = vpack.c.b16 %v211, %v209
    %v252 = vpack.c.b16 %v212, %v210
    %v253 = vpack.c.b16 %v215, %v213
    %v254 = vpack.c.b16 %v216, %v214
    %v255 = vpack.c.b16 %v219, %v217
    %v256 = vpack.c.b16 %v220, %v218
    %v257 = vpack.c.b16 %v223, %v221
    %v258 = vpack.c.b16 %v224, %v222
    %v259 = vpack.c.b16 %v227, %v225
    %v260 = vpack.c.b16 %v228, %v226
    %293 = vmatprep.subr.bf16.mxu0 %v244
    %294 = vmatpush1.bf16.msra.mxu0 %v243
    %295 = vmatprep.subr.bf16.mxu0 %v242
    %296 = vmatpush1.bf16.msra.mxu0 %v241
    %297 = vmatprep.subr.bf16.mxu0 %v240
    %298 = vmatpush1.bf16.msra.mxu0 %v239
    %299 = vmatprep.subr.bf16.mxu0 %v238
    %300 = vmatpush1.bf16.msra.mxu0 %v237
    %301 = vmatprep.subr.bf16.mxu0 %v236
    %302 = vmatpush1.bf16.msra.mxu0 %v235
    %303 = vmatprep.subr.bf16.mxu0 %v234
    %304 = vmatpush1.bf16.msra.mxu0 %v233
    %305 = vmatprep.subr.bf16.mxu0 %v232
    %306 = vmatpush1.bf16.msra.mxu0 %v231
    %307 = vmatprep.subr.bf16.mxu0 %v230
    %308 = vmatpush1.bf16.msra.mxu0 %v229
    %309 = vmatprep.subr.bf16.mxu0 %v260
    %310 = vmatpush2.bf16.msra.mxu0 %v259
    %311 = vmatprep.subr.bf16.mxu0 %v258
    %312 = vmatpush2.bf16.msra.mxu0 %v257
    %313 = vmatprep.subr.bf16.mxu0 %v256
    %314 = vmatpush2.bf16.msra.mxu0 %v255
    %315 = vmatprep.subr.bf16.mxu0 %v254
    %316 = vmatpush2.bf16.msra.mxu0 %v253
    %317 = vmatprep.subr.bf16.mxu0 %v252
    %318 = vmatpush2.bf16.msra.mxu0 %v251
    %319 = vmatprep.subr.bf16.mxu0 %v250
    %320 = vmatpush2.bf16.msra.mxu0 %v249
    %321 = vmatprep.subr.bf16.mxu0 %v248
    %322 = vmatpush2.bf16.msra.mxu0 %v247
    %323 = vmatprep.subr.bf16.mxu0 %v246
    %324 = vmatpush2.bf16.msra.mxu0 %v245
    %325 = vmatprep.mubr.bf16.mxu0 %v130
    %326 = vmatmul.mubr.bf16.gmra.mxu0 %v129
    %v327 = vpop.f32.mrf.mxu0
    %v328 = vadd.f32 %v119, %v327
    %v329 = vpop.f32.mrf.mxu0
    %v330 = vadd.f32 %v123, %v329
    %v331 = vpop.f32.mrf.mxu0
    %v332 = vpop.f32.mrf.mxu0
    %333 = vdwg.mxu0
    %v334 = vmax.f32 %v328, 0.0
    %v335 = vmax.f32 %v330, 0.0
    %v336 = vpack.c.bf16 %v334, %v334
    %v337 = vpack.c.bf16 %v335, %v335
    %v338 = vld [vmem:[#allocation7] sm:$0xff]
    %v339 = vld [vmem:[#allocation7 + $0x8] sm:$0xf]
    %v340 = vld [vmem:[#allocation7 + $0xc] sm:$0xff]
    %v341 = vld [vmem:[#allocation7 + $0x14] sm:$0xf]
    %v342 = vld [vmem:[#allocation7 + $0x18] sm:$0xff]
    %v343 = vld [vmem:[#allocation7 + $0x20] sm:$0xf]
    %v344 = vld [vmem:[#allocation7 + $0x24] sm:$0xff]
    %v345 = vld [vmem:[#allocation7 + $0x2c] sm:$0xf]
    %v346 = vld [vmem:[#allocation7 + $0x30] sm:$0xff]
    %v347 = vld [vmem:[#allocation7 + $0x38] sm:$0xf]
    %v348 = vld [vmem:[#allocation7 + $0x3c] sm:$0xff]
    %v349 = vld [vmem:[#allocation7 + $0x44] sm:$0xf]
    %v350 = vld [vmem:[#allocation7 + $0x48] sm:$0xff]
    %v351 = vld [vmem:[#allocation7 + $0x50] sm:$0xf]
    %v352 = vld [vmem:[#allocation7 + $0x54] sm:$0xff]
    %v353 = vld [vmem:[#allocation7 + $0x5c] sm:$0xf]
    %v354 = vld [vmem:[#allocation7 + $0x60] sm:$0xff]
    %v355 = vld [vmem:[#allocation7 + $0x68] sm:$0xf]
    %v356 = vld [vmem:[#allocation7 + $0x6c] sm:$0xff]
    %v357 = vld [vmem:[#allocation7 + $0x74] sm:$0xf]
    %v358 = vld [vmem:[#allocation7 + $0x78] sm:$0xff]
    %v359 = vld [vmem:[#allocation7 + $0x80] sm:$0xf]
    %v360 = vld [vmem:[#allocation7 + $0x84] sm:$0xff]
    %v361 = vld [vmem:[#allocation7 + $0x8c] sm:$0xf]
    %v362 = vld [vmem:[#allocation7 + $0x90] sm:$0xff]
    %v363 = vld [vmem:[#allocation7 + $0x98] sm:$0xf]
    %v364 = vld [vmem:[#allocation7 + $0x9c] sm:$0xff]
    %v365 = vld [vmem:[#allocation7 + $0xa4] sm:$0xf]
    %v366 = vld [vmem:[#allocation7 + $0xa8] sm:$0xff]
    %v367 = vld [vmem:[#allocation7 + $0xb0] sm:$0xf]
    %v368 = vld [vmem:[#allocation7 + $0xb4] sm:$0xff]
    %v369 = vld [vmem:[#allocation7 + $0xbc] sm:$0xf]
    %v370 = vld [vmem:[#allocation7 + $0xc0] sm:$0xff]
    %v371 = vld [vmem:[#allocation7 + $0xc8] sm:$0xf]
    %v372 = vld [vmem:[#allocation7 + $0xcc] sm:$0xff]
    %v373 = vld [vmem:[#allocation7 + $0xd4] sm:$0xf]
    %v374 = vld [vmem:[#allocation7 + $0xd8] sm:$0xff]
    %v375 = vld [vmem:[#allocation7 + $0xe0] sm:$0xf]
    %v376 = vld [vmem:[#allocation7 + $0xe4] sm:$0xff]
    %v377 = vld [vmem:[#allocation7 + $0xec] sm:$0xf]
    %v378 = vld [vmem:[#allocation7 + $0xf0] sm:$0xff]
    %v379 = vld [vmem:[#allocation7 + $0xf8] sm:$0xf]
    %v380 = vld [vmem:[#allocation7 + $0xfc] sm:$0xff]
    %v381 = vld [vmem:[#allocation7 + $0x104] sm:$0xf]
    %v382 = vld [vmem:[#allocation7 + $0x108] sm:$0xff]
    %v383 = vld [vmem:[#allocation7 + $0x110] sm:$0xf]
    %v384 = vld [vmem:[#allocation7 + $0x114] sm:$0xff]
    %v385 = vld [vmem:[#allocation7 + $0x11c] sm:$0xf]
    %v386 = vld [vmem:[#allocation7 + $0x120] sm:$0xff]
    %v387 = vld [vmem:[#allocation7 + $0x128] sm:$0xf]
    %v388 = vld [vmem:[#allocation7 + $0x12c] sm:$0xff]
    %v389 = vld [vmem:[#allocation7 + $0x134] sm:$0xf]
    %v390 = vld [vmem:[#allocation7 + $0x138] sm:$0xff]
    %v391 = vld [vmem:[#allocation7 + $0x140] sm:$0xf]
    %v392 = vld [vmem:[#allocation7 + $0x144] sm:$0xff]
    %v393 = vld [vmem:[#allocation7 + $0x14c] sm:$0xf]
    %v394 = vld [vmem:[#allocation7 + $0x150] sm:$0xff]
    %v395 = vld [vmem:[#allocation7 + $0x158] sm:$0xf]
    %v396 = vld [vmem:[#allocation7 + $0x15c] sm:$0xff]
    %v397 = vld [vmem:[#allocation7 + $0x164] sm:$0xf]
    %v398 = vld [vmem:[#allocation7 + $0x168] sm:$0xff]
    %v399 = vld [vmem:[#allocation7 + $0x170] sm:$0xf]
    %v400 = vld [vmem:[#allocation7 + $0x174] sm:$0xff]
    %v401 = vld [vmem:[#allocation7 + $0x17c] sm:$0xf]
    %v402 = vld [vmem:[%s4] sm:$0x7]
    %v404 = vlaneseq
    %v405 = vshrl.u32 %v404, 7
    %v406 = vsub.s32 0, %v405
    %v407 = vrot.slane %v402, %v406
    %v408 = vlaneseq
    %v409 = vshrl.u32 %v408, 7
    %v410 = vsub.s32 1, %v409
    %v411 = vrot.slane %v402, %v410
    %v412 = vlaneseq
    %v413 = vshrl.u32 %v412, 7
    %v414 = vsub.s32 2, %v413
    %v415 = vrot.slane %v402, %v414
    %v483 = vunpack.c.l.b16 %v338
    %v484 = vunpack.c.h.b16 %v338
    %v485 = vunpack.c.l.b16 %v339
    %v486 = vunpack.c.l.b16 %v340
    %v487 = vunpack.c.h.b16 %v340
    %v488 = vunpack.c.l.b16 %v341
    %v489 = vunpack.c.l.b16 %v342
    %v490 = vunpack.c.h.b16 %v342
    %v491 = vunpack.c.l.b16 %v343
    %v492 = vunpack.c.l.b16 %v344
    %v493 = vunpack.c.h.b16 %v344
    %v494 = vunpack.c.l.b16 %v345
    %v495 = vunpack.c.l.b16 %v346
    %v496 = vunpack.c.h.b16 %v346
    %v497 = vunpack.c.l.b16 %v347
    %v498 = vunpack.c.l.b16 %v348
    %v499 = vunpack.c.h.b16 %v348
    %v500 = vunpack.c.l.b16 %v349
    %v501 = vunpack.c.l.b16 %v350
    %v502 = vunpack.c.h.b16 %v350
    %v503 = vunpack.c.l.b16 %v351
    %v504 = vunpack.c.l.b16 %v352
    %v505 = vunpack.c.h.b16 %v352
    %v506 = vunpack.c.l.b16 %v353
    %v507 = vunpack.c.l.b16 %v354
    %v508 = vunpack.c.h.b16 %v354
    %v509 = vunpack.c.l.b16 %v355
    %v510 = vunpack.c.l.b16 %v356
    %v511 = vunpack.c.h.b16 %v356
    %v512 = vunpack.c.l.b16 %v357
    %v513 = vunpack.c.l.b16 %v358
    %v514 = vunpack.c.h.b16 %v358
    %v515 = vunpack.c.l.b16 %v359
    %v516 = vunpack.c.l.b16 %v360
    %v517 = vunpack.c.h.b16 %v360
    %v518 = vunpack.c.l.b16 %v361
    %v519 = vunpack.c.l.b16 %v362
    %v520 = vunpack.c.h.b16 %v362
    %v521 = vunpack.c.l.b16 %v363
    %v522 = vunpack.c.l.b16 %v364
    %v523 = vunpack.c.h.b16 %v364
    %v524 = vunpack.c.l.b16 %v365
    %v525 = vunpack.c.l.b16 %v366
    %v526 = vunpack.c.h.b16 %v366
    %v527 = vunpack.c.l.b16 %v367
    %v528 = vunpack.c.l.b16 %v368
    %v529 = vunpack.c.h.b16 %v368
    %v530 = vunpack.c.l.b16 %v369
    %v531 = vunpack.c.l.b16 %v370
    %v532 = vunpack.c.h.b16 %v370
    %v533 = vunpack.c.l.b16 %v371
    %v534 = vunpack.c.l.b16 %v372
    %v535 = vunpack.c.h.b16 %v372
    %v536 = vunpack.c.l.b16 %v373
    %v537 = vunpack.c.l.b16 %v374
    %v538 = vunpack.c.h.b16 %v374
    %v539 = vunpack.c.l.b16 %v375
    %v540 = vunpack.c.l.b16 %v376
    %v541 = vunpack.c.h.b16 %v376
    %v542 = vunpack.c.l.b16 %v377
    %v543 = vunpack.c.l.b16 %v378
    %v544 = vunpack.c.h.b16 %v378
    %v545 = vunpack.c.l.b16 %v379
    %v546 = vunpack.c.l.b16 %v380
    %v547 = vunpack.c.h.b16 %v380
    %v548 = vunpack.c.l.b16 %v381
    %v549 = vunpack.c.l.b16 %v382
    %v550 = vunpack.c.h.b16 %v382
    %v551 = vunpack.c.l.b16 %v383
    %v552 = vunpack.c.l.b16 %v384
    %v553 = vunpack.c.h.b16 %v384
    %v554 = vunpack.c.l.b16 %v385
    %v555 = vunpack.c.l.b16 %v386
    %v556 = vunpack.c.h.b16 %v386
    %v557 = vunpack.c.l.b16 %v387
    %v558 = vunpack.c.l.b16 %v388
    %v559 = vunpack.c.h.b16 %v388
    %v560 = vunpack.c.l.b16 %v389
    %v561 = vunpack.c.l.b16 %v390
    %v562 = vunpack.c.h.b16 %v390
    %v563 = vunpack.c.l.b16 %v391
    %v564 = vunpack.c.l.b16 %v392
    %v565 = vunpack.c.h.b16 %v392
    %v566 = vunpack.c.l.b16 %v393
    %v567 = vunpack.c.l.b16 %v394
    %v568 = vunpack.c.h.b16 %v394
    %v569 = vunpack.c.l.b16 %v395
    %v570 = vunpack.c.l.b16 %v396
    %v571 = vunpack.c.h.b16 %v396
    %v572 = vunpack.c.l.b16 %v397
    %v573 = vunpack.c.l.b16 %v398
    %v574 = vunpack.c.h.b16 %v398
    %v575 = vunpack.c.l.b16 %v399
    %v576 = vunpack.c.l.b16 %v400
    %v577 = vunpack.c.h.b16 %v400
    %v578 = vunpack.c.l.b16 %v401
    %v579 = vpack.c.b16 %v486, %v483
    %v580 = vpack.c.b16 %v487, %v484
    %v581 = vpack.c.b16 %v488, %v485
    %v582 = vpack.c.b16 %v492, %v489
    %v583 = vpack.c.b16 %v493, %v490
    %v584 = vpack.c.b16 %v494, %v491
    %v585 = vpack.c.b16 %v498, %v495
    %v586 = vpack.c.b16 %v499, %v496
    %v587 = vpack.c.b16 %v500, %v497
    %v588 = vpack.c.b16 %v504, %v501
    %v589 = vpack.c.b16 %v505, %v502
    %v590 = vpack.c.b16 %v506, %v503
    %v591 = vpack.c.b16 %v510, %v507
    %v592 = vpack.c.b16 %v511, %v508
    %v593 = vpack.c.b16 %v512, %v509
    %v594 = vpack.c.b16 %v516, %v513
    %v595 = vpack.c.b16 %v517, %v514
    %v596 = vpack.c.b16 %v518, %v515
    %v597 = vpack.c.b16 %v522, %v519
    %v598 = vpack.c.b16 %v523, %v520
    %v599 = vpack.c.b16 %v524, %v521
    %v600 = vpack.c.b16 %v528, %v525
    %v601 = vpack.c.b16 %v529, %v526
    %v602 = vpack.c.b16 %v530, %v527
    %v603 = vpack.c.b16 %v534, %v531
    %v604 = vpack.c.b16 %v535, %v532
    %v605 = vpack.c.b16 %v536, %v533
    %v606 = vpack.c.b16 %v540, %v537
    %v607 = vpack.c.b16 %v541, %v538
    %v608 = vpack.c.b16 %v542, %v539
    %v609 = vpack.c.b16 %v546, %v543
    %v610 = vpack.c.b16 %v547, %v544
    %v611 = vpack.c.b16 %v548, %v545
    %v612 = vpack.c.b16 %v552, %v549
    %v613 = vpack.c.b16 %v553, %v550
    %v614 = vpack.c.b16 %v554, %v551
    %v615 = vpack.c.b16 %v558, %v555
    %v616 = vpack.c.b16 %v559, %v556
    %v617 = vpack.c.b16 %v560, %v557
    %v618 = vpack.c.b16 %v564, %v561
    %v619 = vpack.c.b16 %v565, %v562
    %v620 = vpack.c.b16 %v566, %v563
    %v621 = vpack.c.b16 %v570, %v567
    %v622 = vpack.c.b16 %v571, %v568
    %v623 = vpack.c.b16 %v572, %v569
    %v624 = vpack.c.b16 %v576, %v573
    %v625 = vpack.c.b16 %v577, %v574
    %v626 = vpack.c.b16 %v578, %v575
    %675 = vmatprep.subr.bf16.mxu0 %v601
    %676 = vmatpush1.bf16.msra.mxu0 %v600
    %677 = vmatprep.subr.bf16.mxu0 %v598
    %678 = vmatpush1.bf16.msra.mxu0 %v597
    %679 = vmatprep.subr.bf16.mxu0 %v595
    %680 = vmatpush1.bf16.msra.mxu0 %v594
    %681 = vmatprep.subr.bf16.mxu0 %v592
    %682 = vmatpush1.bf16.msra.mxu0 %v591
    %683 = vmatprep.subr.bf16.mxu0 %v589
    %684 = vmatpush1.bf16.msra.mxu0 %v588
    %685 = vmatprep.subr.bf16.mxu0 %v586
    %686 = vmatpush1.bf16.msra.mxu0 %v585
    %687 = vmatprep.subr.bf16.mxu0 %v583
    %688 = vmatpush1.bf16.msra.mxu0 %v582
    %689 = vmatprep.subr.bf16.mxu0 %v580
    %690 = vmatpush1.bf16.msra.mxu0 %v579
    %691 = vmatprep.subr.bf16.mxu0 %v625
    %692 = vmatpush2.bf16.msra.mxu0 %v624
    %693 = vmatprep.subr.bf16.mxu0 %v622
    %694 = vmatpush2.bf16.msra.mxu0 %v621
    %695 = vmatprep.subr.bf16.mxu0 %v619
    %696 = vmatpush2.bf16.msra.mxu0 %v618
    %697 = vmatprep.subr.bf16.mxu0 %v616
    %698 = vmatpush2.bf16.msra.mxu0 %v615
    %699 = vmatprep.subr.bf16.mxu0 %v613
    %700 = vmatpush2.bf16.msra.mxu0 %v612
    %701 = vmatprep.subr.bf16.mxu0 %v610
    %702 = vmatpush2.bf16.msra.mxu0 %v609
    %703 = vmatprep.subr.bf16.mxu0 %v607
    %704 = vmatpush2.bf16.msra.mxu0 %v606
    %705 = vmatprep.subr.bf16.mxu0 %v604
    %706 = vmatpush2.bf16.msra.mxu0 %v603
    %707 = vmatprep.mubr.bf16.mxu0 %v337
    %708 = vmatmul.mubr.bf16.gmra.mxu0 %v336
    %v709 = vpop.f32.mrf.mxu0
    %v710 = vadd.f32 %v407, %v709
    %v711 = vpop.f32.mrf.mxu0
    %v712 = vadd.f32 %v411, %v711
    %v713 = vpop.f32.mrf.mxu0
    %v714 = vpop.f32.mrf.mxu0
    %715 = vdwg.mxu0
    %716 = vmatprep.subr.bf16.mxu0 0
    %717 = vmatpush1.bf16.msra.mxu0 %v602
    %718 = vmatprep.subr.bf16.mxu0 0
    %719 = vmatpush1.bf16.msra.mxu0 %v599
    %720 = vmatprep.subr.bf16.mxu0 0
    %721 = vmatpush1.bf16.msra.mxu0 %v596
    %722 = vmatprep.subr.bf16.mxu0 0
    %723 = vmatpush1.bf16.msra.mxu0 %v593
    %724 = vmatprep.subr.bf16.mxu0 0
    %725 = vmatpush1.bf16.msra.mxu0 %v590
    %726 = vmatprep.subr.bf16.mxu0 0
    %727 = vmatpush1.bf16.msra.mxu0 %v587
    %728 = vmatprep.subr.bf16.mxu0 0
    %729 = vmatpush1.bf16.msra.mxu0 %v584
    %730 = vmatprep.subr.bf16.mxu0 0
    %731 = vmatpush1.bf16.msra.mxu0 %v581
    %732 = vmatprep.subr.bf16.mxu0 0
    %733 = vmatpush2.bf16.msra.mxu0 %v626
    %734 = vmatprep.subr.bf16.mxu0 0
    %735 = vmatpush2.bf16.msra.mxu0 %v623
    %736 = vmatprep.subr.bf16.mxu0 0
    %737 = vmatpush2.bf16.msra.mxu0 %v620
    %738 = vmatprep.subr.bf16.mxu0 0
    %739 = vmatpush2.bf16.msra.mxu0 %v617
    %740 = vmatprep.subr.bf16.mxu0 0
    %741 = vmatpush2.bf16.msra.mxu0 %v614
    %742 = vmatprep.subr.bf16.mxu0 0
    %743 = vmatpush2.bf16.msra.mxu0 %v611
    %744 = vmatprep.subr.bf16.mxu0 0
    %745 = vmatpush2.bf16.msra.mxu0 %v608
    %746 = vmatprep.subr.bf16.mxu0 0
    %747 = vmatpush2.bf16.msra.mxu0 %v605
    %748 = vmatprep.mubr.bf16.mxu0 %v337
    %749 = vmatmul.mubr.bf16.gmra.mxu0 %v336
    %v750 = vpop.f32.mrf.mxu0
    %v751 = vadd.f32 %v415, %v750
    %v752 = vpop.f32.mrf.mxu0
    %v753 = vpop.f32.mrf.mxu0
    %v754 = vpop.f32.mrf.mxu0
    %755 = vdwg.mxu0
    %v756 = vmax.f32 %v710, 0.0
    %v757 = vmax.f32 %v712, 0.0
    %v758 = vmax.f32 %v751, 0.0
    %v759 = vpack.c.bf16 %v756, %v756
    %v760 = vpack.c.bf16 %v757, %v757
    %v761 = vpack.c.bf16 %v758, %v758
    %v762 = vld [vmem:[#allocation8] sm:$0xff]
    %v763 = vld [vmem:[#allocation8 + $0x8] sm:$0xff]
    %v764 = vld [vmem:[#allocation8 + $0x10] sm:$0xff]
    %v765 = vld [vmem:[#allocation8 + $0x18] sm:$0xff]
    %v766 = vld [vmem:[#allocation8 + $0x20] sm:$0xff]
    %v767 = vld [vmem:[#allocation8 + $0x28] sm:$0xff]
    %v768 = vld [vmem:[#allocation8 + $0x30] sm:$0xff]
    %v769 = vld [vmem:[#allocation8 + $0x38] sm:$0xff]
    %v770 = vld [vmem:[#allocation8 + $0x40] sm:$0xff]
    %v771 = vld [vmem:[#allocation8 + $0x48] sm:$0xff]
    %v772 = vld [vmem:[#allocation8 + $0x50] sm:$0xff]
    %v773 = vld [vmem:[#allocation8 + $0x58] sm:$0xff]
    %v774 = vld [vmem:[#allocation8 + $0x60] sm:$0xff]
    %v775 = vld [vmem:[#allocation8 + $0x68] sm:$0xff]
    %v776 = vld [vmem:[#allocation8 + $0x70] sm:$0xff]
    %v777 = vld [vmem:[#allocation8 + $0x78] sm:$0xff]
    %v778 = vld [vmem:[#allocation8 + $0x80] sm:$0xff]
    %v779 = vld [vmem:[#allocation8 + $0x88] sm:$0xff]
    %v780 = vld [vmem:[#allocation8 + $0x90] sm:$0xff]
    %v781 = vld [vmem:[#allocation8 + $0x98] sm:$0xff]
    %v782 = vld [vmem:[#allocation8 + $0xa0] sm:$0xff]
    %v783 = vld [vmem:[#allocation8 + $0xa8] sm:$0xff]
    %v784 = vld [vmem:[#allocation8 + $0xb0] sm:$0xff]
    %v785 = vld [vmem:[#allocation8 + $0xb8] sm:$0xff]
    %v786 = vld [vmem:[#allocation8 + $0xc0] sm:$0xff]
    %v787 = vld [vmem:[#allocation8 + $0xc8] sm:$0xff]
    %v788 = vld [vmem:[#allocation8 + $0xd0] sm:$0xff]
    %v789 = vld [vmem:[#allocation8 + $0xd8] sm:$0xff]
    %v790 = vld [vmem:[#allocation8 + $0xe0] sm:$0xff]
    %v791 = vld [vmem:[#allocation8 + $0xe8] sm:$0xff]
    %v792 = vld [vmem:[#allocation8 + $0xf0] sm:$0xff]
    %v793 = vld [vmem:[#allocation8 + $0xf8] sm:$0xff]
    %v794 = vld [vmem:[#allocation8 + $0x100] sm:$0xff]
    %v795 = vld [vmem:[#allocation8 + $0x108] sm:$0xff]
    %v796 = vld [vmem:[#allocation8 + $0x110] sm:$0xff]
    %v797 = vld [vmem:[#allocation8 + $0x118] sm:$0xff]
    %v798 = vld [vmem:[#allocation8 + $0x120] sm:$0xff]
    %v799 = vld [vmem:[#allocation8 + $0x128] sm:$0xff]
    %v800 = vld [vmem:[#allocation8 + $0x130] sm:$0xff]
    %v801 = vld [vmem:[#allocation8 + $0x138] sm:$0xff]
    %v802 = vld [vmem:[#allocation8 + $0x140] sm:$0xff]
    %v803 = vld [vmem:[#allocation8 + $0x148] sm:$0xff]
    %v804 = vld [vmem:[#allocation8 + $0x150] sm:$0xff]
    %v805 = vld [vmem:[#allocation8 + $0x158] sm:$0xff]
    %v806 = vld [vmem:[#allocation8 + $0x160] sm:$0xff]
    %v807 = vld [vmem:[#allocation8 + $0x168] sm:$0xff]
    %v808 = vld [vmem:[#allocation8 + $0x170] sm:$0xff]
    %v809 = vld [vmem:[#allocation8 + $0x178] sm:$0xff]
    %v810 = vld [vmem:[%s6] sm:$0x3]
    %v812 = vlaneseq
    %v813 = vshrl.u32 %v812, 7
    %v814 = vsub.s32 0, %v813
    %v815 = vrot.slane %v810, %v814
    %v816 = vlaneseq
    %v817 = vshrl.u32 %v816, 7
    %v818 = vsub.s32 1, %v817
    %v819 = vrot.slane %v810, %v818
    %v870 = vunpack.c.l.b16 %v762
    %v871 = vunpack.c.h.b16 %v762
    %v872 = vunpack.c.l.b16 %v763
    %v873 = vunpack.c.h.b16 %v763
    %v874 = vunpack.c.l.b16 %v764
    %v875 = vunpack.c.h.b16 %v764
    %v876 = vunpack.c.l.b16 %v765
    %v877 = vunpack.c.h.b16 %v765
    %v878 = vunpack.c.l.b16 %v766
    %v879 = vunpack.c.h.b16 %v766
    %v880 = vunpack.c.l.b16 %v767
    %v881 = vunpack.c.h.b16 %v767
    %v882 = vunpack.c.l.b16 %v768
    %v883 = vunpack.c.h.b16 %v768
    %v884 = vunpack.c.l.b16 %v769
    %v885 = vunpack.c.h.b16 %v769
    %v886 = vunpack.c.l.b16 %v770
    %v887 = vunpack.c.h.b16 %v770
    %v888 = vunpack.c.l.b16 %v771
    %v889 = vunpack.c.h.b16 %v771
    %v890 = vunpack.c.l.b16 %v772
    %v891 = vunpack.c.h.b16 %v772
    %v892 = vunpack.c.l.b16 %v773
    %v893 = vunpack.c.h.b16 %v773
    %v894 = vunpack.c.l.b16 %v774
    %v895 = vunpack.c.h.b16 %v774
    %v896 = vunpack.c.l.b16 %v775
    %v897 = vunpack.c.h.b16 %v775
    %v898 = vunpack.c.l.b16 %v776
    %v899 = vunpack.c.h.b16 %v776
    %v900 = vunpack.c.l.b16 %v777
    %v901 = vunpack.c.h.b16 %v777
    %v902 = vunpack.c.l.b16 %v778
    %v903 = vunpack.c.h.b16 %v778
    %v904 = vunpack.c.l.b16 %v779
    %v905 = vunpack.c.h.b16 %v779
    %v906 = vunpack.c.l.b16 %v780
    %v907 = vunpack.c.h.b16 %v780
    %v908 = vunpack.c.l.b16 %v781
    %v909 = vunpack.c.h.b16 %v781
    %v910 = vunpack.c.l.b16 %v782
    %v911 = vunpack.c.h.b16 %v782
    %v912 = vunpack.c.l.b16 %v783
    %v913 = vunpack.c.h.b16 %v783
    %v914 = vunpack.c.l.b16 %v784
    %v915 = vunpack.c.h.b16 %v784
    %v916 = vunpack.c.l.b16 %v785
    %v917 = vunpack.c.h.b16 %v785
    %v918 = vunpack.c.l.b16 %v786
    %v919 = vunpack.c.h.b16 %v786
    %v920 = vunpack.c.l.b16 %v787
    %v921 = vunpack.c.h.b16 %v787
    %v922 = vunpack.c.l.b16 %v788
    %v923 = vunpack.c.h.b16 %v788
    %v924 = vunpack.c.l.b16 %v789
    %v925 = vunpack.c.h.b16 %v789
    %v926 = vunpack.c.l.b16 %v790
    %v927 = vunpack.c.h.b16 %v790
    %v928 = vunpack.c.l.b16 %v791
    %v929 = vunpack.c.h.b16 %v791
    %v930 = vunpack.c.l.b16 %v792
    %v931 = vunpack.c.h.b16 %v792
    %v932 = vunpack.c.l.b16 %v793
    %v933 = vunpack.c.h.b16 %v793
    %v934 = vunpack.c.l.b16 %v794
    %v935 = vunpack.c.h.b16 %v794
    %v936 = vunpack.c.l.b16 %v795
    %v937 = vunpack.c.h.b16 %v795
    %v938 = vunpack.c.l.b16 %v796
    %v939 = vunpack.c.h.b16 %v796
    %v940 = vunpack.c.l.b16 %v797
    %v941 = vunpack.c.h.b16 %v797
    %v942 = vunpack.c.l.b16 %v798
    %v943 = vunpack.c.h.b16 %v798
    %v944 = vunpack.c.l.b16 %v799
    %v945 = vunpack.c.h.b16 %v799
    %v946 = vunpack.c.l.b16 %v800
    %v947 = vunpack.c.h.b16 %v800
    %v948 = vunpack.c.l.b16 %v801
    %v949 = vunpack.c.h.b16 %v801
    %v950 = vunpack.c.l.b16 %v802
    %v951 = vunpack.c.h.b16 %v802
    %v952 = vunpack.c.l.b16 %v803
    %v953 = vunpack.c.h.b16 %v803
    %v954 = vunpack.c.l.b16 %v804
    %v955 = vunpack.c.h.b16 %v804
    %v956 = vunpack.c.l.b16 %v805
    %v957 = vunpack.c.h.b16 %v805
    %v958 = vunpack.c.l.b16 %v806
    %v959 = vunpack.c.h.b16 %v806
    %v960 = vunpack.c.l.b16 %v807
    %v961 = vunpack.c.h.b16 %v807
    %v962 = vunpack.c.l.b16 %v808
    %v963 = vunpack.c.h.b16 %v808
    %v964 = vunpack.c.l.b16 %v809
    %v965 = vunpack.c.h.b16 %v809
    %v966 = vpack.c.b16 %v872, %v870
    %v967 = vpack.c.b16 %v873, %v871
    %v968 = vpack.c.b16 %v876, %v874
    %v969 = vpack.c.b16 %v877, %v875
    %v970 = vpack.c.b16 %v880, %v878
    %v971 = vpack.c.b16 %v881, %v879
    %v972 = vpack.c.b16 %v884, %v882
    %v973 = vpack.c.b16 %v885, %v883
    %v974 = vpack.c.b16 %v888, %v886
    %v975 = vpack.c.b16 %v889, %v887
    %v976 = vpack.c.b16 %v892, %v890
    %v977 = vpack.c.b16 %v893, %v891
    %v978 = vpack.c.b16 %v896, %v894
    %v979 = vpack.c.b16 %v897, %v895
    %v980 = vpack.c.b16 %v900, %v898
    %v981 = vpack.c.b16 %v901, %v899
    %v982 = vpack.c.b16 %v904, %v902
    %v983 = vpack.c.b16 %v905, %v903
    %v984 = vpack.c.b16 %v908, %v906
    %v985 = vpack.c.b16 %v909, %v907
    %v986 = vpack.c.b16 %v912, %v910
    %v987 = vpack.c.b16 %v913, %v911
    %v988 = vpack.c.b16 %v916, %v914
    %v989 = vpack.c.b16 %v917, %v915
    %v990 = vpack.c.b16 %v920, %v918
    %v991 = vpack.c.b16 %v921, %v919
    %v992 = vpack.c.b16 %v924, %v922
    %v993 = vpack.c.b16 %v925, %v923
    %v994 = vpack.c.b16 %v928, %v926
    %v995 = vpack.c.b16 %v929, %v927
    %v996 = vpack.c.b16 %v932, %v930
    %v997 = vpack.c.b16 %v933, %v931
    %v998 = vpack.c.b16 %v936, %v934
    %v999 = vpack.c.b16 %v937, %v935
    %v1000 = vpack.c.b16 %v940, %v938
    %v1001 = vpack.c.b16 %v941, %v939
    %v1002 = vpack.c.b16 %v944, %v942
    %v1003 = vpack.c.b16 %v945, %v943
    %v1004 = vpack.c.b16 %v948, %v946
    %v1005 = vpack.c.b16 %v949, %v947
    %v1006 = vpack.c.b16 %v952, %v950
    %v1007 = vpack.c.b16 %v953, %v951
    %v1008 = vpack.c.b16 %v956, %v954
    %v1009 = vpack.c.b16 %v957, %v955
    %v1010 = vpack.c.b16 %v960, %v958
    %v1011 = vpack.c.b16 %v961, %v959
    %v1012 = vpack.c.b16 %v964, %v962
    %v1013 = vpack.c.b16 %v965, %v963
    %1062 = vmatprep.subr.bf16.mxu0 %v981
    %1063 = vmatpush1.bf16.msra.mxu0 %v980
    %1064 = vmatprep.subr.bf16.mxu0 %v979
    %1065 = vmatpush1.bf16.msra.mxu0 %v978
    %1066 = vmatprep.subr.bf16.mxu0 %v977
    %1067 = vmatpush1.bf16.msra.mxu0 %v976
    %1068 = vmatprep.subr.bf16.mxu0 %v975
    %1069 = vmatpush1.bf16.msra.mxu0 %v974
    %1070 = vmatprep.subr.bf16.mxu0 %v973
    %1071 = vmatpush1.bf16.msra.mxu0 %v972
    %1072 = vmatprep.subr.bf16.mxu0 %v971
    %1073 = vmatpush1.bf16.msra.mxu0 %v970
    %1074 = vmatprep.subr.bf16.mxu0 %v969
    %1075 = vmatpush1.bf16.msra.mxu0 %v968
    %1076 = vmatprep.subr.bf16.mxu0 %v967
    %1077 = vmatpush1.bf16.msra.mxu0 %v966
    %1078 = vmatprep.subr.bf16.mxu0 %v997
    %1079 = vmatpush2.bf16.msra.mxu0 %v996
    %1080 = vmatprep.subr.bf16.mxu0 %v995
    %1081 = vmatpush2.bf16.msra.mxu0 %v994
    %1082 = vmatprep.subr.bf16.mxu0 %v993
    %1083 = vmatpush2.bf16.msra.mxu0 %v992
    %1084 = vmatprep.subr.bf16.mxu0 %v991
    %1085 = vmatpush2.bf16.msra.mxu0 %v990
    %1086 = vmatprep.subr.bf16.mxu0 %v989
    %1087 = vmatpush2.bf16.msra.mxu0 %v988
    %1088 = vmatprep.subr.bf16.mxu0 %v987
    %1089 = vmatpush2.bf16.msra.mxu0 %v986
    %1090 = vmatprep.subr.bf16.mxu0 %v985
    %1091 = vmatpush2.bf16.msra.mxu0 %v984
    %1092 = vmatprep.subr.bf16.mxu0 %v983
    %1093 = vmatpush2.bf16.msra.mxu0 %v982
    %1094 = vmatprep.mubr.bf16.mxu0 %v760
    %1095 = vmatmul.mubr.bf16.gmra.mxu0 %v759
    %v1096 = vpop.f32.mrf.mxu0
    %v1097 = vadd.f32 %v815, %v1096
    %v1098 = vpop.f32.mrf.mxu0
    %v1099 = vadd.f32 %v819, %v1098
    %v1100 = vpop.f32.mrf.mxu0
    %v1101 = vpop.f32.mrf.mxu0
    %1102 = vdwg.mxu0
    %1103 = vmatprep.subr.bf16.mxu0 %v1013
    %1104 = vmatpush1.bf16.msra.mxu0 %v1012
    %1105 = vmatprep.subr.bf16.mxu0 %v1011
    %1106 = vmatpush1.bf16.msra.mxu0 %v1010
    %1107 = vmatprep.subr.bf16.mxu0 %v1009
    %1108 = vmatpush1.bf16.msra.mxu0 %v1008
    %1109 = vmatprep.subr.bf16.mxu0 %v1007
    %1110 = vmatpush1.bf16.msra.mxu0 %v1006
    %1111 = vmatprep.subr.bf16.mxu0 %v1005
    %1112 = vmatpush1.bf16.msra.mxu0 %v1004
    %1113 = vmatprep.subr.bf16.mxu0 %v1003
    %1114 = vmatpush1.bf16.msra.mxu0 %v1002
    %1115 = vmatprep.subr.bf16.mxu0 %v1001
    %1116 = vmatpush1.bf16.msra.mxu0 %v1000
    %1117 = vmatprep.subr.bf16.mxu0 %v999
    %1118 = vmatpush1.bf16.msra.mxu0 %v998
    %1119 = vmatprep.subr.bf16.mxu0 0
    %1120 = vmatpush2.bf16.msra.mxu0 0
    %1121 = vmatprep.subr.bf16.mxu0 0
    %1122 = vmatpush2.bf16.msra.mxu0 0
    %1123 = vmatprep.subr.bf16.mxu0 0
    %1124 = vmatpush2.bf16.msra.mxu0 0
    %1125 = vmatprep.subr.bf16.mxu0 0
    %1126 = vmatpush2.bf16.msra.mxu0 0
    %1127 = vmatprep.subr.bf16.mxu0 0
    %1128 = vmatpush2.bf16.msra.mxu0 0
    %1129 = vmatprep.subr.bf16.mxu0 0
    %1130 = vmatpush2.bf16.msra.mxu0 0
    %1131 = vmatprep.subr.bf16.mxu0 0
    %1132 = vmatpush2.bf16.msra.mxu0 0
    %1133 = vmatprep.subr.bf16.mxu0 0
    %1134 = vmatpush2.bf16.msra.mxu0 0
    %1135 = vmatprep.mubr.bf16.mxu0 0
    %1136 = vmatmul.mubr.bf16.gmra.mxu0 %v761
    %v1137 = vpop.f32.mrf.mxu0
    %v1138 = vadd.f32 %v1097, %v1137
    %v1139 = vpop.f32.mrf.mxu0
    %v1140 = vadd.f32 %v1099, %v1139
    %v1141 = vpop.f32.mrf.mxu0
    %v1142 = vpop.f32.mrf.mxu0
    %1143 = vdwg.mxu0
    %v1144 = vmax.f32 %v1138, 0.0
    %v1145 = vmax.f32 %v1140, 0.0
    %v1146 = vpack.c.bf16 %v1144, %v1144
    %v1147 = vpack.c.bf16 %v1145, %v1145
    %v1150 = vunpack.c.l.b16 %v1146
    %v1151 = vunpack.c.l.b16 %v1147
    %v1152 = vpack.c.b16 %v1151, %v1150
    %1154 = vst [vmem:[#allocation10] sm:$0xff] %v1152
    // Predicated region
    $region46: #{tpu_custom_call.1} parent=1 // pred_check
      _
    $region47: #{tpu_custom_call.1} parent=1 // pred_check_branch
      %1156 = sbr.rel (0) target = $region49
    $region48: #{tpu_custom_call.1} parent=1 // pred_region
      %s1158 = ssub.s32 128, 128
      %1159 = vsyncadd [#allocation4], %s1158
      %s1161 = sshll.u32 [#allocation10], 4
      %s1162 = int_to_ptr.vmem [resolvable:$true] %s1161
      %1164 = dma.vmem_to_hbm [thread:$0]  %s1162, 128, %s7, [#allocation4]
    $region49: #{tpu_custom_call.1} parent=1 // pred_fallthru
      _
    // Predicated region
    $region50: #{tpu_custom_call.1} parent=1 // pred_check
      _
    $region51: #{tpu_custom_call.1} parent=1 // pred_check_branch
      %1166 = sbr.rel (0) target = $region53
    $region52: #{tpu_custom_call.1} parent=1 // pred_region
      %1167 = dma.done [#allocation4], 128
    $region53: #{tpu_custom_call.1} parent=1 // pred_fallthru
      _
    %1168 = vsyncpa [#allocation3], 1
    %1169 = vsyncpa [#allocation6], 1
    %1170 = vsyncpa [#allocation9], 1
    %1171 = vsyncpa [#allocation4], 1

</llo_original>
